<compile_context>
chip_gen: v6e
topology: v6e:2x2x1
jax: 0.10.0
libtpu: 0.0.40
codegen_flags: <defaults>
</compile_context>

<pallas_src>
import jax
import jax.numpy as jnp
import numpy as np
from jax.experimental import pallas as pl
from jax.experimental.pallas import tpu as pltpu

BN_EPS = 1e-5
LANE = 128  # TPU lane width: feature/output dims are zero-padded to this


def _small_act_kernel(idx_ref, table_ref, w1_ref, w2_ref, wo_ref, vec_ref,
                      out_ref):
    # ---- fused gather: one-hot(indices) @ (emb + W) -------------------------
    idx = idx_ref[...]                                    # [B, 1] int32
    b, n = idx.shape[0], table_ref.shape[0]
    onehot = (idx == jax.lax.broadcasted_iota(jnp.int32, (b, n), 1)
              ).astype(jnp.float32)                       # [B, N]
    x = jnp.dot(onehot, table_ref[...],
                preferred_element_type=jnp.float32)       # [B, 128]

    # ---- packed bias / gamma / beta tile (one vreg) -------------------------
    fc1_b = vec_ref[0:1, :]
    bn1_g = vec_ref[1:2, :]
    bn1_b = vec_ref[2:3, :]
    fc2_b = vec_ref[3:4, :]
    bn2_g = vec_ref[4:5, :]
    bn2_b = vec_ref[5:6, :]
    fco_b = vec_ref[6:7, :]

    def batchnorm(h, gamma, beta):
        # training-mode BatchNorm1d; single-pass biased variance
        mean = jnp.mean(h, axis=0, keepdims=True)
        mean_sq = jnp.mean(h * h, axis=0, keepdims=True)
        var = jnp.maximum(mean_sq - mean * mean, 0.0)
        return (h - mean) * jax.lax.rsqrt(var + BN_EPS) * gamma + beta

    # ---- block 1 -------------------------------------------------------------
    h1 = jnp.dot(x, w1_ref[...], preferred_element_type=jnp.float32) + fc1_b
    x1 = jnp.tanh(batchnorm(h1, bn1_g, bn1_b)) + x

    # ---- block 2 -------------------------------------------------------------
    h2 = jnp.dot(x1, w2_ref[...], preferred_element_type=jnp.float32) + fc2_b
    x2 = jnp.tanh(batchnorm(h2, bn2_g, bn2_b)) + x1

    # ---- output projection (lane-dense, unmasked store) ---------------------
    out_ref[...] = (jnp.dot(x2, wo_ref[...],
                            preferred_element_type=jnp.float32) + fco_b)


def prepare_kernel_params(params):
    """One-time, call-invariant packing:
    fuse emb + linear_weight, zero-pad everything to 128 lanes, and stack the
    seven bias/gamma/beta vectors into a single (8,128) tile."""
    def pad_cols(a, width=LANE):
        return jnp.pad(a, ((0, 0), (0, width - a.shape[-1])))

    def pad_rows(a, height=LANE):
        return jnp.pad(a, ((0, height - a.shape[0]), (0, 0)))

    def row(v):
        return pad_cols(v.reshape(1, -1))

    table = pad_cols(params["microbe_genomic_emb"] + params["linear_weight"])

    vecs = jnp.concatenate([
        row(params["fc1_b"]), row(params["bn1_gamma"]), row(params["bn1_beta"]),
        row(params["fc2_b"]), row(params["bn2_gamma"]), row(params["bn2_beta"]),
        row(params["fc_out_b"]), jnp.zeros((1, LANE), jnp.float32),
    ], axis=0)                                            # [8, 128]

    return {
        "table": table,                                   # [N, 128]
        "w1": pad_rows(pad_cols(params["fc1_w_t"])),      # [128, 128]
        "w2": pad_rows(pad_cols(params["fc2_w_t"])),      # [128, 128]
        "wo": pad_rows(pad_cols(params["fc_out_w_t"])),   # [128, 128]
        "vecs": vecs,                                     # [8, 128]
        "output_dim": int(params["fc_out_b"].shape[-1]),
    }


def small_activation_network_forward(indices, kparams):
    """indices: int [B]; kparams: output of prepare_kernel_params.
    Returns [B, output_dim] fp32."""
    B = indices.shape[0]
    O = kparams["output_dim"]
    N = kparams["table"].shape[0]
    idx2d = indices.astype(jnp.int32).reshape(B, 1)

    args = (idx2d, kparams["table"], kparams["w1"], kparams["w2"],
            kparams["wo"], kparams["vecs"])

    vmem = pl.BlockSpec(memory_space=pltpu.MemorySpace.VMEM)
    flops = 2 * B * (N * LANE + 3 * LANE * LANE)
    bytes_accessed = 4 * (B + N * LANE + 3 * LANE * LANE + 8 * LANE + B * LANE)

    out_pad = pl.pallas_call(
        _small_act_kernel,
        out_shape=jax.ShapeDtypeStruct((B, LANE), jnp.float32),
        in_specs=[vmem] * len(args),
        out_specs=vmem,
        cost_estimate=pl.CostEstimate(flops=flops,
                                      transcendentals=2 * B * LANE + 2 * LANE,
                                      bytes_accessed=bytes_accessed),
    )(*args)
    return out_pad[:, :O]


def build_params(key, microbe_nodes, microbe_emb_dim, output_dim,
                 fixed_rows, limit_rows):
    """Deterministic, in-script parameter construction mirroring __init__.
    Stores logical (unpadded) params; weights pre-transposed to [in, out]."""
    ks = jax.random.split(key, 9)

    # microbe_genomic_emb = (m_e_1 + m_e_2) / 2
    m_e_1 = jax.random.normal(ks[0], (microbe_nodes, microbe_emb_dim), jnp.float32)
    m_e_2 = jax.random.normal(ks[1], (microbe_nodes, microbe_emb_dim), jnp.float32)
    microbe_genomic_emb = (m_e_1 + m_e_2) / 2.0

    # linear_layer: Linear(emb_dim, nodes) -> weight [nodes, emb_dim]
    gain = ((microbe_nodes + microbe_emb_dim) / (microbe_nodes * 2)) ** 0.5
    xavier_std_lin = gain * (2.0 / (microbe_nodes + microbe_emb_dim)) ** 0.5
    lin_w = xavier_std_lin * jax.random.normal(
        ks[2], (microbe_nodes, microbe_emb_dim), jnp.float32)

    lin_w_np = np.array(lin_w)
    for i in fixed_rows:                       # zero fixed rows (1-based)
        lin_w_np[int(i) - 1, :] = 0.0
    for i in range(microbe_nodes):             # clamp limit rows (1-based)
        if i + 1 in limit_rows:
            limit = abs(lin_w_np[i, 0] / microbe_emb_dim)
            lin_w_np[i, :] = np.clip(lin_w_np[i, :], -limit, limit)
    lin_w = jnp.asarray(lin_w_np)

    def xavier(k, fan_out, fan_in):
        std = (2.0 / (fan_in + fan_out)) ** 0.5
        return std * jax.random.normal(k, (fan_out, fan_in), jnp.float32)

    def linear_bias(k, fan_in, fan_out):
        bound = 1.0 / (fan_in ** 0.5)
        return jax.random.uniform(k, (fan_out,), jnp.float32, -bound, bound)

    E, O = microbe_emb_dim, output_dim
    fc1_w = xavier(ks[3], E, E)
    fc1_b = linear_bias(ks[4], E, E)
    fc2_w = xavier(ks[5], E, E)
    fc2_b = linear_bias(ks[6], E, E)
    bound_out = 1.0 / (E ** 0.5)
    fc_out_w = jax.random.uniform(ks[7], (O, E), jnp.float32, -bound_out, bound_out)
    fc_out_b = linear_bias(ks[8], E, O)

    return {
        "microbe_genomic_emb": microbe_genomic_emb,
        "linear_weight": lin_w,
        "fc1_w_t": fc1_w.T, "fc1_b": fc1_b,
        "bn1_gamma": jnp.ones((E,), jnp.float32),
        "bn1_beta": jnp.zeros((E,), jnp.float32),
        "fc2_w_t": fc2_w.T, "fc2_b": fc2_b,
        "bn2_gamma": jnp.ones((E,), jnp.float32),
        "bn2_beta": jnp.zeros((E,), jnp.float32),
        "fc_out_w_t": fc_out_w.T, "fc_out_b": fc_out_b,
    }


def _reference_forward(indices, params):
    """Pure-JAX reference for correctness checking (unpadded math)."""
    x = jnp.take(params["microbe_genomic_emb"] + params["linear_weight"],
                 indices, axis=0)

    def bn(h, g, b):
        mean = jnp.mean(h, axis=0, keepdims=True)
        var = jnp.mean((h - mean) ** 2, axis=0, keepdims=True)
        return (h - mean) / jnp.sqrt(var + BN_EPS) * g + b

    h1 = x @ params["fc1_w_t"] + params["fc1_b"]
    x1 = jnp.tanh(bn(h1, params["bn1_gamma"], params["bn1_beta"])) + x
    h2 = x1 @ params["fc2_w_t"] + params["fc2_b"]
    x2 = jnp.tanh(bn(h2, params["bn2_gamma"], params["bn2_beta"])) + x1
    return x2 @ params["fc_out_w_t"] + params["fc_out_b"]


if __name__ == "__main__":
    microbe_nodes = 16
    microbe_emb_dim = 32
    output_dim = 4
    batch = 8
    fixed_rows = [1, 3]     # 1-based, as in the PyTorch module
    limit_rows = [2, 5]     # 1-based

    key = jax.random.PRNGKey(0)
    pkey, ikey = jax.random.split(key)
    params = build_params(pkey, microbe_nodes, microbe_emb_dim, output_dim,
                          fixed_rows, limit_rows)
    kparams = prepare_kernel_params(params)     # one-time, call-invariant
    indices = jax.random.randint(ikey, (batch,), 0, microbe_nodes, jnp.int32)

    out = small_activation_network_forward(indices, kparams)
    out = jax.block_until_ready(out)

    ref = _reference_forward(indices, params)
    np.testing.assert_allclose(np.asarray(out), np.asarray(ref),
                               rtol=1e-4, atol=1e-4)
    print("KERNEL_OK")
</pallas_src>

<mosaic_0001>
module attributes {stable_mosaic.version = 11 : i64} {
  func.func @_small_act_kernel(%arg0: memref<8x1xi32, #tpu.memory_space<vmem>>, %arg1: memref<16x128xf32, #tpu.memory_space<vmem>>, %arg2: memref<128x128xf32, #tpu.memory_space<vmem>>, %arg3: memref<128x128xf32, #tpu.memory_space<vmem>>, %arg4: memref<128x128xf32, #tpu.memory_space<vmem>>, %arg5: memref<8x128xf32, #tpu.memory_space<vmem>>, %arg6: memref<8x128xf32, #tpu.memory_space<vmem>>) attributes {dimension_semantics = [], scalar_prefetch = 0 : i64, scratch_operands = 0 : i64, tpu.core_type = #tpu.core_type<tc>} {
    %c0 = arith.constant 0 : index
    %c0_0 = arith.constant 0 : index
    %0 = vector.load %arg0[%c0, %c0_0] : memref<8x1xi32, #tpu.memory_space<vmem>>, vector<8x1xi32>
    %1 = tpu.iota {dimensions = array<i32: 1>} : vector<8x16xi32>
    %2 = vector.broadcast %0 : vector<8x1xi32> to vector<8x16xi32>
    %3 = arith.cmpi eq, %2, %1 : vector<8x16xi32>
    %4 = arith.extui %3 : vector<8x16xi1> to vector<8x16xi32>
    %5 = arith.sitofp %4 : vector<8x16xi32> to vector<8x16xf32>
    %c0_1 = arith.constant 0 : index
    %c0_2 = arith.constant 0 : index
    %6 = vector.load %arg1[%c0_1, %c0_2] : memref<16x128xf32, #tpu.memory_space<vmem>>, vector<16x128xf32>
    %cst = arith.constant dense<0.000000e+00> : vector<8x128xf32>
    %7 = tpu.matmul %5, %6, %cst {dimension_numbers = #tpu.dot_dimension_numbers<[1], [0], [0], [1], [0, 0, 1, 1], [], []>} : vector<8x16xf32>, vector<16x128xf32>, vector<8x128xf32> -> vector<8x128xf32>
    %c0_3 = arith.constant 0 : index
    %c0_4 = arith.constant 0 : index
    %8 = vector.load %arg5[%c0_3, %c0_4] : memref<8x128xf32, #tpu.memory_space<vmem>>, vector<1x128xf32>
    %c1 = arith.constant 1 : index
    %c0_5 = arith.constant 0 : index
    %9 = vector.load %arg5[%c1, %c0_5] : memref<8x128xf32, #tpu.memory_space<vmem>>, vector<1x128xf32>
    %c2 = arith.constant 2 : index
    %c0_6 = arith.constant 0 : index
    %10 = vector.load %arg5[%c2, %c0_6] : memref<8x128xf32, #tpu.memory_space<vmem>>, vector<1x128xf32>
    %c3 = arith.constant 3 : index
    %c0_7 = arith.constant 0 : index
    %11 = vector.load %arg5[%c3, %c0_7] : memref<8x128xf32, #tpu.memory_space<vmem>>, vector<1x128xf32>
    %c4 = arith.constant 4 : index
    %c0_8 = arith.constant 0 : index
    %12 = vector.load %arg5[%c4, %c0_8] : memref<8x128xf32, #tpu.memory_space<vmem>>, vector<1x128xf32>
    %c5 = arith.constant 5 : index
    %c0_9 = arith.constant 0 : index
    %13 = vector.load %arg5[%c5, %c0_9] : memref<8x128xf32, #tpu.memory_space<vmem>>, vector<1x128xf32>
    %c6 = arith.constant 6 : index
    %c0_10 = arith.constant 0 : index
    %14 = vector.load %arg5[%c6, %c0_10] : memref<8x128xf32, #tpu.memory_space<vmem>>, vector<1x128xf32>
    %c0_11 = arith.constant 0 : index
    %c0_12 = arith.constant 0 : index
    %15 = vector.load %arg2[%c0_11, %c0_12] : memref<128x128xf32, #tpu.memory_space<vmem>>, vector<128x128xf32>
    %cst_13 = arith.constant dense<0.000000e+00> : vector<8x128xf32>
    %16 = tpu.matmul %7, %15, %cst_13 {dimension_numbers = #tpu.dot_dimension_numbers<[1], [0], [0], [1], [0, 0, 1, 1], [], []>} : vector<8x128xf32>, vector<128x128xf32>, vector<8x128xf32> -> vector<8x128xf32>
    %17 = vector.broadcast %8 : vector<1x128xf32> to vector<8x128xf32>
    %18 = arith.addf %16, %17 : vector<8x128xf32>
    %cst_14 = arith.constant dense<0.000000e+00> : vector<128xf32>
    %19 = vector.multi_reduction <add>, %18, %cst_14 [0] : vector<8x128xf32> to vector<128xf32>
    %20 = vector.shape_cast %19 : vector<128xf32> to vector<1x128xf32>
    %cst_15 = arith.constant 8.000000e+00 : f32
    %21 = vector.broadcast %cst_15 : f32 to vector<1x128xf32>
    %22 = arith.divf %20, %21 : vector<1x128xf32>
    %23 = arith.mulf %18, %18 : vector<8x128xf32>
    %cst_16 = arith.constant dense<0.000000e+00> : vector<128xf32>
    %24 = vector.multi_reduction <add>, %23, %cst_16 [0] : vector<8x128xf32> to vector<128xf32>
    %25 = vector.shape_cast %24 : vector<128xf32> to vector<1x128xf32>
    %cst_17 = arith.constant 8.000000e+00 : f32
    %26 = vector.broadcast %cst_17 : f32 to vector<1x128xf32>
    %27 = arith.divf %25, %26 : vector<1x128xf32>
    %28 = arith.mulf %22, %22 : vector<1x128xf32>
    %29 = arith.subf %27, %28 : vector<1x128xf32>
    %cst_18 = arith.constant 0.000000e+00 : f32
    %30 = vector.broadcast %cst_18 : f32 to vector<1x128xf32>
    %31 = arith.maximumf %29, %30 : vector<1x128xf32>
    %32 = vector.broadcast %22 : vector<1x128xf32> to vector<8x128xf32>
    %33 = arith.subf %18, %32 : vector<8x128xf32>
    %cst_19 = arith.constant 9.99999974E-6 : f32
    %34 = vector.broadcast %cst_19 : f32 to vector<1x128xf32>
    %35 = arith.addf %31, %34 : vector<1x128xf32>
    %36 = math.rsqrt %35 : vector<1x128xf32>
    %37 = vector.broadcast %36 : vector<1x128xf32> to vector<8x128xf32>
    %38 = arith.mulf %33, %37 : vector<8x128xf32>
    %39 = vector.broadcast %9 : vector<1x128xf32> to vector<8x128xf32>
    %40 = arith.mulf %38, %39 : vector<8x128xf32>
    %41 = vector.broadcast %10 : vector<1x128xf32> to vector<8x128xf32>
    %42 = arith.addf %40, %41 : vector<8x128xf32>
    %43 = math.tanh %42 : vector<8x128xf32>
    %44 = arith.addf %43, %7 : vector<8x128xf32>
    %c0_20 = arith.constant 0 : index
    %c0_21 = arith.constant 0 : index
    %45 = vector.load %arg3[%c0_20, %c0_21] : memref<128x128xf32, #tpu.memory_space<vmem>>, vector<128x128xf32>
    %cst_22 = arith.constant dense<0.000000e+00> : vector<8x128xf32>
    %46 = tpu.matmul %44, %45, %cst_22 {dimension_numbers = #tpu.dot_dimension_numbers<[1], [0], [0], [1], [0, 0, 1, 1], [], []>} : vector<8x128xf32>, vector<128x128xf32>, vector<8x128xf32> -> vector<8x128xf32>
    %47 = vector.broadcast %11 : vector<1x128xf32> to vector<8x128xf32>
    %48 = arith.addf %46, %47 : vector<8x128xf32>
    %cst_23 = arith.constant dense<0.000000e+00> : vector<128xf32>
    %49 = vector.multi_reduction <add>, %48, %cst_23 [0] : vector<8x128xf32> to vector<128xf32>
    %50 = vector.shape_cast %49 : vector<128xf32> to vector<1x128xf32>
    %cst_24 = arith.constant 8.000000e+00 : f32
    %51 = vector.broadcast %cst_24 : f32 to vector<1x128xf32>
    %52 = arith.divf %50, %51 : vector<1x128xf32>
    %53 = arith.mulf %48, %48 : vector<8x128xf32>
    %cst_25 = arith.constant dense<0.000000e+00> : vector<128xf32>
    %54 = vector.multi_reduction <add>, %53, %cst_25 [0] : vector<8x128xf32> to vector<128xf32>
    %55 = vector.shape_cast %54 : vector<128xf32> to vector<1x128xf32>
    %cst_26 = arith.constant 8.000000e+00 : f32
    %56 = vector.broadcast %cst_26 : f32 to vector<1x128xf32>
    %57 = arith.divf %55, %56 : vector<1x128xf32>
    %58 = arith.mulf %52, %52 : vector<1x128xf32>
    %59 = arith.subf %57, %58 : vector<1x128xf32>
    %cst_27 = arith.constant 0.000000e+00 : f32
    %60 = vector.broadcast %cst_27 : f32 to vector<1x128xf32>
    %61 = arith.maximumf %59, %60 : vector<1x128xf32>
    %62 = vector.broadcast %52 : vector<1x128xf32> to vector<8x128xf32>
    %63 = arith.subf %48, %62 : vector<8x128xf32>
    %cst_28 = arith.constant 9.99999974E-6 : f32
    %64 = vector.broadcast %cst_28 : f32 to vector<1x128xf32>
    %65 = arith.addf %61, %64 : vector<1x128xf32>
    %66 = math.rsqrt %65 : vector<1x128xf32>
    %67 = vector.broadcast %66 : vector<1x128xf32> to vector<8x128xf32>
    %68 = arith.mulf %63, %67 : vector<8x128xf32>
    %69 = vector.broadcast %12 : vector<1x128xf32> to vector<8x128xf32>
    %70 = arith.mulf %68, %69 : vector<8x128xf32>
    %71 = vector.broadcast %13 : vector<1x128xf32> to vector<8x128xf32>
    %72 = arith.addf %70, %71 : vector<8x128xf32>
    %73 = math.tanh %72 : vector<8x128xf32>
    %74 = arith.addf %73, %44 : vector<8x128xf32>
    %c0_29 = arith.constant 0 : index
    %c0_30 = arith.constant 0 : index
    %75 = vector.load %arg4[%c0_29, %c0_30] : memref<128x128xf32, #tpu.memory_space<vmem>>, vector<128x128xf32>
    %cst_31 = arith.constant dense<0.000000e+00> : vector<8x128xf32>
    %76 = tpu.matmul %74, %75, %cst_31 {dimension_numbers = #tpu.dot_dimension_numbers<[1], [0], [0], [1], [0, 0, 1, 1], [], []>} : vector<8x128xf32>, vector<128x128xf32>, vector<8x128xf32> -> vector<8x128xf32>
    %77 = vector.broadcast %14 : vector<1x128xf32> to vector<8x128xf32>
    %78 = arith.addf %76, %77 : vector<8x128xf32>
    %c0_32 = arith.constant 0 : index
    %c0_33 = arith.constant 0 : index
    %79 = vector.load %arg6[%c0_32, %c0_33] : memref<8x128xf32, #tpu.memory_space<vmem>>, vector<8x128xf32>
    tpu.vector_store %arg6[%c0_32, %c0_33], %78 {strides = array<i32>} : memref<8x128xf32, #tpu.memory_space<vmem>>, vector<8x128xf32>,
    return
  }
}

</mosaic_0001>

<llo_original>
// kernel: tpu_custom_call.1
$region0: #{tpu_custom_call.1}
  #allocation0 [shape = 'u32[]', space=smem, size = 0x4, offset = 0x4, fixed_abs, tag = 'smem constant byte address 0x4 - core index']
  #allocation1 [shape = 'u32[144,128]{1,0:T(1,128)}', space=vmem, size = 0x12000, scoped, tag = 'internal scratch']
  %s0 = inlined_call_operand.vmem [shape: s32[8,1], index: 0, kind: input, shape index: {}]
  %s1 = inlined_call_operand.hbm [shape: f32[16,128], index: 1, kind: input, shape index: {}]
  %s2 = inlined_call_operand.hbm [shape: f32[128,128], index: 2, kind: input, shape index: {}]
  %s3 = inlined_call_operand.hbm [shape: f32[128,128], index: 3, kind: input, shape index: {}]
  %s4 = inlined_call_operand.hbm [shape: f32[128,128], index: 4, kind: input, shape index: {}]
  %s5 = inlined_call_operand.vmem [shape: f32[8,128], index: 5, kind: input, shape index: {}]
  %s6 = inlined_call_operand.hbm [shape: f32[8,128], index: 6, kind: output, shape index: {}]
  %s7 = sld [smem:[#allocation0]]
  $region50: #{tpu_custom_call.1} parent=0
    _
  %s9 = ssub.s32 1, %s7
  %s10 = scalar_select 0, %s9, %s7
  $region1: #{tpu_custom_call.1} parent=0
    #allocation2 [shape = 'u8[8192]{0}', space=vmem, size = 0x2000, scoped, tag = 'input window, operand 1, single buffered']
    #allocation3 [shape = 's32[1]{0}', space=sflag, size = 0x4, scoped, tag = 'scoped memory for tpu_custom_call.1']
    #allocation4 [shape = 's32[1]{0}', space=sflag, size = 0x4, scoped, tag = 'scoped memory for tpu_custom_call.1']
    #allocation5 [shape = 'u8[65536]{0}', space=vmem, size = 0x10000, scoped, tag = 'input window, operand 2, single buffered']
    #allocation6 [shape = 's32[1]{0}', space=sflag, size = 0x4, scoped, tag = 'scoped memory for tpu_custom_call.1']
    #allocation7 [shape = 'u8[65536]{0}', space=vmem, size = 0x10000, scoped, tag = 'input window, operand 3, single buffered']
    #allocation8 [shape = 'u8[65536]{0}', space=vmem, size = 0x10000, scoped, tag = 'input window, operand 4, single buffered']
    #allocation9 [shape = 's32[1]{0}', space=sflag, size = 0x4, scoped, tag = 'scoped memory for tpu_custom_call.1']
    #allocation10 [shape = 'u8[4096]{0}', space=vmem, size = 0x1000, scoped, tag = 'output window, operand 0, single buffered']
    %11 = vsyncpa [#allocation3], 0
    %12 = vsyncpa [#allocation6], 0
    %13 = vsyncpa [#allocation9], 0
    %14 = vsyncpa [#allocation4], 0
    // Predicated region
    $region2: #{tpu_custom_call.1} parent=1 // pred_check
      _
    $region3: #{tpu_custom_call.1} parent=1 // pred_check_branch
      %16 = sbr.rel (0) target = $region5
    $region4: #{tpu_custom_call.1} parent=1 // pred_region
      _
    $region5: #{tpu_custom_call.1} parent=1 // pred_fallthru
      _
    // Predicated region
    $region6: #{tpu_custom_call.1} parent=1 // pred_check
      _
    $region7: #{tpu_custom_call.1} parent=1 // pred_check_branch
      %18 = sbr.rel (0) target = $region9
    $region8: #{tpu_custom_call.1} parent=1 // pred_region
      %s20 = ssub.s32 256, 256
      %21 = vsyncadd [#allocation3], %s20
      %s22 = sshll.u32 [#allocation2], 4
      %s23 = int_to_ptr.vmem [resolvable:$true] %s22
      %28 = dma.hbm_to_vmem [thread:$0]  %s1, 256, %s23, [#allocation3], 128, 128, 8
    $region9: #{tpu_custom_call.1} parent=1 // pred_fallthru
      _
    // Predicated region
    $region10: #{tpu_custom_call.1} parent=1 // pred_check
      _
    $region11: #{tpu_custom_call.1} parent=1 // pred_check_branch
      %30 = sbr.rel (0) target = $region13
    $region12: #{tpu_custom_call.1} parent=1 // pred_region
      %s32 = ssub.s32 2048, 2048
      %33 = vsyncadd [#allocation6], %s32
      %s34 = sshll.u32 [#allocation5], 4
      %s35 = int_to_ptr.vmem [resolvable:$true] %s34
      %40 = dma.hbm_to_vmem [thread:$0]  %s2, 2048, %s35, [#allocation6], 128, 128, 8
    $region13: #{tpu_custom_call.1} parent=1 // pred_fallthru
      _
    // Predicated region
    $region14: #{tpu_custom_call.1} parent=1 // pred_check
      _
    $region15: #{tpu_custom_call.1} parent=1 // pred_check_branch
      %42 = sbr.rel (0) target = $region17
    $region16: #{tpu_custom_call.1} parent=1 // pred_region
      %s44 = ssub.s32 2048, 2048
      %45 = vsyncadd [#allocation6], %s44
      %s46 = sshll.u32 [#allocation7], 4
      %s47 = int_to_ptr.vmem [resolvable:$true] %s46
      %52 = dma.hbm_to_vmem [thread:$0]  %s3, 2048, %s47, [#allocation6], 128, 128, 8
    $region17: #{tpu_custom_call.1} parent=1 // pred_fallthru
      _
    // Predicated region
    $region18: #{tpu_custom_call.1} parent=1 // pred_check
      _
    $region19: #{tpu_custom_call.1} parent=1 // pred_check_branch
      %54 = sbr.rel (0) target = $region21
    $region20: #{tpu_custom_call.1} parent=1 // pred_region
      %s56 = ssub.s32 2048, 2048
      %57 = vsyncadd [#allocation9], %s56
      %s58 = sshll.u32 [#allocation8], 4
      %s59 = int_to_ptr.vmem [resolvable:$true] %s58
      %64 = dma.hbm_to_vmem [thread:$0]  %s4, 2048, %s59, [#allocation9], 128, 128, 8
    $region21: #{tpu_custom_call.1} parent=1 // pred_fallthru
      _
    // Predicated region
    $region22: #{tpu_custom_call.1} parent=1 // pred_check
      _
    $region23: #{tpu_custom_call.1} parent=1 // pred_check_branch
      %66 = sbr.rel (0) target = $region25
    $region24: #{tpu_custom_call.1} parent=1 // pred_region
      _
    $region25: #{tpu_custom_call.1} parent=1 // pred_fallthru
      _
    // Predicated region
    $region26: #{tpu_custom_call.1} parent=1 // pred_check
      _
    $region27: #{tpu_custom_call.1} parent=1 // pred_check_branch
      %68 = sbr.rel (0) target = $region29
    $region28: #{tpu_custom_call.1} parent=1 // pred_region
      %69 = dma.done [#allocation3], 256
    $region29: #{tpu_custom_call.1} parent=1 // pred_fallthru
      _
    // Predicated region
    $region30: #{tpu_custom_call.1} parent=1 // pred_check
      _
    $region31: #{tpu_custom_call.1} parent=1 // pred_check_branch
      %71 = sbr.rel (0) target = $region33
    $region32: #{tpu_custom_call.1} parent=1 // pred_region
      %72 = dma.done [#allocation6], 2048
    $region33: #{tpu_custom_call.1} parent=1 // pred_fallthru
      _
    // Predicated region
    $region34: #{tpu_custom_call.1} parent=1 // pred_check
      _
    $region35: #{tpu_custom_call.1} parent=1 // pred_check_branch
      %74 = sbr.rel (0) target = $region37
    $region36: #{tpu_custom_call.1} parent=1 // pred_region
      %75 = dma.done [#allocation6], 2048
    $region37: #{tpu_custom_call.1} parent=1 // pred_fallthru
      _
    // Predicated region
    $region38: #{tpu_custom_call.1} parent=1 // pred_check
      _
    $region39: #{tpu_custom_call.1} parent=1 // pred_check_branch
      %77 = sbr.rel (0) target = $region41
    $region40: #{tpu_custom_call.1} parent=1 // pred_region
      %78 = dma.done [#allocation9], 2048
    $region41: #{tpu_custom_call.1} parent=1 // pred_fallthru
      _
    %v79 = vld [vmem:[%s0] sm:$0xff]
    %v80 = vlaneseq
    %v81 = vand.u32 %v80, 127
    %82 = vset.pattern.permute.xlu0 0
    %83 = vperm.xlu0 %82, %v79
    %v84 = vpop.permute.xlu0 %83
    %vm85 = vcmp.eq.s32.totalorder %v84, %v81
    %v86 = vsel %vm85, 1, 0
    %v87 = vcvt.s32.f32 %v86
    %v88 = vld [vmem:[#allocation2] sm:$0xff]
    %v89 = vld [vmem:[#allocation2 + $0x8] sm:$0xff]
    %vm90 = vcmask 130048
    %v92 = vsel %vm90, %v87, 0
    %94 = vmatprep.subr.mxu0 0.0
    %95 = vmatpush1.msra.mxu0 0.0
    %96 = vmatprep.subr.mxu0 0.0
    %97 = vmatpush1.msra.mxu0 0.0
    %98 = vmatprep.subr.mxu0 0.0
    %99 = vmatpush1.msra.mxu0 0.0
    %100 = vmatprep.subr.mxu0 0.0
    %101 = vmatpush1.msra.mxu0 0.0
    %102 = vmatprep.subr.mxu0 0.0
    %103 = vmatpush1.msra.mxu0 0.0
    %104 = vmatprep.subr.mxu0 0.0
    %105 = vmatpush1.msra.mxu0 0.0
    %106 = vmatprep.subr.mxu0 0.0
    %107 = vmatpush1.msra.mxu0 0.0
    %108 = vmatprep.subr.mxu0 0.0
    %109 = vmatpush1.msra.mxu0 0.0
    %110 = vmatprep.subr.mxu0 0.0
    %111 = vmatpush1.msra.mxu0 0.0
    %112 = vmatprep.subr.mxu0 0.0
    %113 = vmatpush1.msra.mxu0 0.0
    %114 = vmatprep.subr.mxu0 0.0
    %115 = vmatpush1.msra.mxu0 0.0
    %116 = vmatprep.subr.mxu0 0.0
    %117 = vmatpush1.msra.mxu0 0.0
    %118 = vmatprep.subr.mxu0 0.0
    %119 = vmatpush1.msra.mxu0 0.0
    %120 = vmatprep.subr.mxu0 0.0
    %121 = vmatpush1.msra.mxu0 0.0
    %122 = vmatprep.subr.mxu0 0.0
    %123 = vmatpush1.msra.mxu0 %v89
    %124 = vmatprep.subr.mxu0 0.0
    %125 = vmatpush1.msra.mxu0 %v88
    %126 = vmatprep.subr.mxu0 0.0
    %127 = vmatpush2.msra.mxu0 0.0
    %128 = vmatprep.subr.mxu0 0.0
    %129 = vmatpush2.msra.mxu0 0.0
    %130 = vmatprep.subr.mxu0 0.0
    %131 = vmatpush2.msra.mxu0 0.0
    %132 = vmatprep.subr.mxu0 0.0
    %133 = vmatpush2.msra.mxu0 0.0
    %134 = vmatprep.subr.mxu0 0.0
    %135 = vmatpush2.msra.mxu0 0.0
    %136 = vmatprep.subr.mxu0 0.0
    %137 = vmatpush2.msra.mxu0 0.0
    %138 = vmatprep.subr.mxu0 0.0
    %139 = vmatpush2.msra.mxu0 0.0
    %140 = vmatprep.subr.mxu0 0.0
    %141 = vmatpush2.msra.mxu0 0.0
    %142 = vmatprep.subr.mxu0 0.0
    %143 = vmatpush2.msra.mxu0 0.0
    %144 = vmatprep.subr.mxu0 0.0
    %145 = vmatpush2.msra.mxu0 0.0
    %146 = vmatprep.subr.mxu0 0.0
    %147 = vmatpush2.msra.mxu0 0.0
    %148 = vmatprep.subr.mxu0 0.0
    %149 = vmatpush2.msra.mxu0 0.0
    %150 = vmatprep.subr.mxu0 0.0
    %151 = vmatpush2.msra.mxu0 0.0
    %152 = vmatprep.subr.mxu0 0.0
    %153 = vmatpush2.msra.mxu0 0.0
    %154 = vmatprep.subr.mxu0 0.0
    %155 = vmatpush2.msra.mxu0 0.0
    %156 = vmatprep.subr.mxu0 0.0
    %157 = vmatpush2.msra.mxu0 0.0
    %158 = vmatprep.mubr.f32.mxu0 0.0
    %159 = vmatmul.mubr.f32.gmra.mxu0 %v92
    %v160 = vpop.f32.mrf.mxu0
    %v161 = vadd.f32 0.0, %v160
    %v162 = vpop.f32.mrf.mxu0
    %163 = vdwg.mxu0
    %v164 = vld [vmem:[%s5] sm:$0x1]
    %v165 = vld [vmem:[%s5 + $0x1] sm:$0x1]
    %v166 = vld [vmem:[%s5 + $0x2] sm:$0x1]
    %v167 = vld [vmem:[%s5 + $0x3] sm:$0x1]
    %v168 = vld [vmem:[%s5 + $0x4] sm:$0x1]
    %v169 = vld [vmem:[%s5 + $0x5] sm:$0x1]
    %v170 = vld [vmem:[%s5 + $0x6] sm:$0x1]
    %v171 = vld [vmem:[#allocation5] sm:$0xff]
    %v172 = vld [vmem:[#allocation5 + $0x8] sm:$0xff]
    %v173 = vld [vmem:[#allocation5 + $0x10] sm:$0xff]
    %v174 = vld [vmem:[#allocation5 + $0x18] sm:$0xff]
    %v175 = vld [vmem:[#allocation5 + $0x20] sm:$0xff]
    %v176 = vld [vmem:[#allocation5 + $0x28] sm:$0xff]
    %v177 = vld [vmem:[#allocation5 + $0x30] sm:$0xff]
    %v178 = vld [vmem:[#allocation5 + $0x38] sm:$0xff]
    %v179 = vld [vmem:[#allocation5 + $0x40] sm:$0xff]
    %v180 = vld [vmem:[#allocation5 + $0x48] sm:$0xff]
    %v181 = vld [vmem:[#allocation5 + $0x50] sm:$0xff]
    %v182 = vld [vmem:[#allocation5 + $0x58] sm:$0xff]
    %v183 = vld [vmem:[#allocation5 + $0x60] sm:$0xff]
    %v184 = vld [vmem:[#allocation5 + $0x68] sm:$0xff]
    %v185 = vld [vmem:[#allocation5 + $0x70] sm:$0xff]
    %v186 = vld [vmem:[#allocation5 + $0x78] sm:$0xff]
    %v187 = vlaneseq
    %v188 = vshrl.u32 %v187, 7
    %v189 = vsub.s32 0, %v188
    %v190 = vrot.slane %v164, %v189
    %191 = vmatprep.subr.mxu0 0.0
    %192 = vmatpush1.msra.mxu0 %v186
    %193 = vmatprep.subr.mxu0 0.0
    %194 = vmatpush1.msra.mxu0 %v185
    %195 = vmatprep.subr.mxu0 0.0
    %196 = vmatpush1.msra.mxu0 %v184
    %197 = vmatprep.subr.mxu0 0.0
    %198 = vmatpush1.msra.mxu0 %v183
    %199 = vmatprep.subr.mxu0 0.0
    %200 = vmatpush1.msra.mxu0 %v182
    %201 = vmatprep.subr.mxu0 0.0
    %202 = vmatpush1.msra.mxu0 %v181
    %203 = vmatprep.subr.mxu0 0.0
    %204 = vmatpush1.msra.mxu0 %v180
    %205 = vmatprep.subr.mxu0 0.0
    %206 = vmatpush1.msra.mxu0 %v179
    %207 = vmatprep.subr.mxu0 0.0
    %208 = vmatpush1.msra.mxu0 %v178
    %209 = vmatprep.subr.mxu0 0.0
    %210 = vmatpush1.msra.mxu0 %v177
    %211 = vmatprep.subr.mxu0 0.0
    %212 = vmatpush1.msra.mxu0 %v176
    %213 = vmatprep.subr.mxu0 0.0
    %214 = vmatpush1.msra.mxu0 %v175
    %215 = vmatprep.subr.mxu0 0.0
    %216 = vmatpush1.msra.mxu0 %v174
    %217 = vmatprep.subr.mxu0 0.0
    %218 = vmatpush1.msra.mxu0 %v173
    %219 = vmatprep.subr.mxu0 0.0
    %220 = vmatpush1.msra.mxu0 %v172
    %221 = vmatprep.subr.mxu0 0.0
    %222 = vmatpush1.msra.mxu0 %v171
    %223 = vmatprep.subr.mxu0 0.0
    %224 = vmatpush2.msra.mxu0 0.0
    %225 = vmatprep.subr.mxu0 0.0
    %226 = vmatpush2.msra.mxu0 0.0
    %227 = vmatprep.subr.mxu0 0.0
    %228 = vmatpush2.msra.mxu0 0.0
    %229 = vmatprep.subr.mxu0 0.0
    %230 = vmatpush2.msra.mxu0 0.0
    %231 = vmatprep.subr.mxu0 0.0
    %232 = vmatpush2.msra.mxu0 0.0
    %233 = vmatprep.subr.mxu0 0.0
    %234 = vmatpush2.msra.mxu0 0.0
    %235 = vmatprep.subr.mxu0 0.0
    %236 = vmatpush2.msra.mxu0 0.0
    %237 = vmatprep.subr.mxu0 0.0
    %238 = vmatpush2.msra.mxu0 0.0
    %239 = vmatprep.subr.mxu0 0.0
    %240 = vmatpush2.msra.mxu0 0.0
    %241 = vmatprep.subr.mxu0 0.0
    %242 = vmatpush2.msra.mxu0 0.0
    %243 = vmatprep.subr.mxu0 0.0
    %244 = vmatpush2.msra.mxu0 0.0
    %245 = vmatprep.subr.mxu0 0.0
    %246 = vmatpush2.msra.mxu0 0.0
    %247 = vmatprep.subr.mxu0 0.0
    %248 = vmatpush2.msra.mxu0 0.0
    %249 = vmatprep.subr.mxu0 0.0
    %250 = vmatpush2.msra.mxu0 0.0
    %251 = vmatprep.subr.mxu0 0.0
    %252 = vmatpush2.msra.mxu0 0.0
    %253 = vmatprep.subr.mxu0 0.0
    %254 = vmatpush2.msra.mxu0 0.0
    %255 = vmatprep.mubr.f32.mxu0 0.0
    %256 = vmatmul.mubr.f32.gmra.mxu0 %v161
    %v257 = vpop.f32.mrf.mxu0
    %v258 = vadd.f32 %v190, %v257
    %v259 = vpop.f32.mrf.mxu0
    %260 = vdwg.mxu0
    %v261 = vrot.slane %v258, 4
    %v262 = vadd.f32 %v258, %v261
    %v263 = vrot.slane %v262, 2
    %v264 = vadd.f32 %v262, %v263
    %v265 = vrot.slane %v264, 1
    %v266 = vadd.f32 %v264, %v265
    %v267 = vrcp.pop 8.0
    %v268 = vmul.f32 %v266, %v267
    %v269 = vmul.f32 %v258, %v258
    %v270 = vrot.slane %v269, 4
    %v271 = vadd.f32 %v269, %v270
    %v272 = vrot.slane %v271, 2
    %v273 = vadd.f32 %v271, %v272
    %v274 = vrot.slane %v273, 1
    %v275 = vadd.f32 %v273, %v274
    %v276 = vmul.f32 %v275, %v267
    %v277 = vmul.f32 %v268, %v268
    %v278 = vsub.f32 %v276, %v277
    %v279 = vmax.f32 %v278, 0.0
    %v280 = vsub.f32 %v258, %v268
    %v281 = vadd.f32 %v279, 1e-05
    %v282 = vrsqrt.pop %v281
    %v283 = vmul.f32 %v280, %v282
    %v284 = vlaneseq
    %v285 = vshrl.u32 %v284, 7
    %v286 = vsub.s32 0, %v285
    %v287 = vrot.slane %v165, %v286
    %v288 = vmul.f32 %v283, %v287
    %v289 = vlaneseq
    %v290 = vshrl.u32 %v289, 7
    %v291 = vsub.s32 0, %v290
    %v292 = vrot.slane %v166, %v291
    %v293 = vadd.f32 %v288, %v292
    %v294 = vtanh.pop %v293
    %v295 = vadd.f32 %v294, %v161
    %v296 = vld [vmem:[#allocation7] sm:$0xff]
    %v297 = vld [vmem:[#allocation7 + $0x8] sm:$0xff]
    %v298 = vld [vmem:[#allocation7 + $0x10] sm:$0xff]
    %v299 = vld [vmem:[#allocation7 + $0x18] sm:$0xff]
    %v300 = vld [vmem:[#allocation7 + $0x20] sm:$0xff]
    %v301 = vld [vmem:[#allocation7 + $0x28] sm:$0xff]
    %v302 = vld [vmem:[#allocation7 + $0x30] sm:$0xff]
    %v303 = vld [vmem:[#allocation7 + $0x38] sm:$0xff]
    %v304 = vld [vmem:[#allocation7 + $0x40] sm:$0xff]
    %v305 = vld [vmem:[#allocation7 + $0x48] sm:$0xff]
    %v306 = vld [vmem:[#allocation7 + $0x50] sm:$0xff]
    %v307 = vld [vmem:[#allocation7 + $0x58] sm:$0xff]
    %v308 = vld [vmem:[#allocation7 + $0x60] sm:$0xff]
    %v309 = vld [vmem:[#allocation7 + $0x68] sm:$0xff]
    %v310 = vld [vmem:[#allocation7 + $0x70] sm:$0xff]
    %v311 = vld [vmem:[#allocation7 + $0x78] sm:$0xff]
    %v312 = vlaneseq
    %v313 = vshrl.u32 %v312, 7
    %v314 = vsub.s32 0, %v313
    %v315 = vrot.slane %v167, %v314
    %316 = vmatprep.subr.mxu0 0.0
    %317 = vmatpush1.msra.mxu0 %v311
    %318 = vmatprep.subr.mxu0 0.0
    %319 = vmatpush1.msra.mxu0 %v310
    %320 = vmatprep.subr.mxu0 0.0
    %321 = vmatpush1.msra.mxu0 %v309
    %322 = vmatprep.subr.mxu0 0.0
    %323 = vmatpush1.msra.mxu0 %v308
    %324 = vmatprep.subr.mxu0 0.0
    %325 = vmatpush1.msra.mxu0 %v307
    %326 = vmatprep.subr.mxu0 0.0
    %327 = vmatpush1.msra.mxu0 %v306
    %328 = vmatprep.subr.mxu0 0.0
    %329 = vmatpush1.msra.mxu0 %v305
    %330 = vmatprep.subr.mxu0 0.0
    %331 = vmatpush1.msra.mxu0 %v304
    %332 = vmatprep.subr.mxu0 0.0
    %333 = vmatpush1.msra.mxu0 %v303
    %334 = vmatprep.subr.mxu0 0.0
    %335 = vmatpush1.msra.mxu0 %v302
    %336 = vmatprep.subr.mxu0 0.0
    %337 = vmatpush1.msra.mxu0 %v301
    %338 = vmatprep.subr.mxu0 0.0
    %339 = vmatpush1.msra.mxu0 %v300
    %340 = vmatprep.subr.mxu0 0.0
    %341 = vmatpush1.msra.mxu0 %v299
    %342 = vmatprep.subr.mxu0 0.0
    %343 = vmatpush1.msra.mxu0 %v298
    %344 = vmatprep.subr.mxu0 0.0
    %345 = vmatpush1.msra.mxu0 %v297
    %346 = vmatprep.subr.mxu0 0.0
    %347 = vmatpush1.msra.mxu0 %v296
    %348 = vmatprep.subr.mxu0 0.0
    %349 = vmatpush2.msra.mxu0 0.0
    %350 = vmatprep.subr.mxu0 0.0
    %351 = vmatpush2.msra.mxu0 0.0
    %352 = vmatprep.subr.mxu0 0.0
    %353 = vmatpush2.msra.mxu0 0.0
    %354 = vmatprep.subr.mxu0 0.0
    %355 = vmatpush2.msra.mxu0 0.0
    %356 = vmatprep.subr.mxu0 0.0
    %357 = vmatpush2.msra.mxu0 0.0
    %358 = vmatprep.subr.mxu0 0.0
    %359 = vmatpush2.msra.mxu0 0.0
    %360 = vmatprep.subr.mxu0 0.0
    %361 = vmatpush2.msra.mxu0 0.0
    %362 = vmatprep.subr.mxu0 0.0
    %363 = vmatpush2.msra.mxu0 0.0
    %364 = vmatprep.subr.mxu0 0.0
    %365 = vmatpush2.msra.mxu0 0.0
    %366 = vmatprep.subr.mxu0 0.0
    %367 = vmatpush2.msra.mxu0 0.0
    %368 = vmatprep.subr.mxu0 0.0
    %369 = vmatpush2.msra.mxu0 0.0
    %370 = vmatprep.subr.mxu0 0.0
    %371 = vmatpush2.msra.mxu0 0.0
    %372 = vmatprep.subr.mxu0 0.0
    %373 = vmatpush2.msra.mxu0 0.0
    %374 = vmatprep.subr.mxu0 0.0
    %375 = vmatpush2.msra.mxu0 0.0
    %376 = vmatprep.subr.mxu0 0.0
    %377 = vmatpush2.msra.mxu0 0.0
    %378 = vmatprep.subr.mxu0 0.0
    %379 = vmatpush2.msra.mxu0 0.0
    %380 = vmatprep.mubr.f32.mxu0 0.0
    %381 = vmatmul.mubr.f32.gmra.mxu0 %v295
    %v382 = vpop.f32.mrf.mxu0
    %v383 = vadd.f32 %v315, %v382
    %v384 = vpop.f32.mrf.mxu0
    %385 = vdwg.mxu0
    %v386 = vrot.slane %v383, 4
    %v387 = vadd.f32 %v383, %v386
    %v388 = vrot.slane %v387, 2
    %v389 = vadd.f32 %v387, %v388
    %v390 = vrot.slane %v389, 1
    %v391 = vadd.f32 %v389, %v390
    %v392 = vmul.f32 %v391, %v267
    %v393 = vmul.f32 %v383, %v383
    %v394 = vrot.slane %v393, 4
    %v395 = vadd.f32 %v393, %v394
    %v396 = vrot.slane %v395, 2
    %v397 = vadd.f32 %v395, %v396
    %v398 = vrot.slane %v397, 1
    %v399 = vadd.f32 %v397, %v398
    %v400 = vmul.f32 %v399, %v267
    %v401 = vmul.f32 %v392, %v392
    %v402 = vsub.f32 %v400, %v401
    %v403 = vmax.f32 %v402, 0.0
    %v404 = vsub.f32 %v383, %v392
    %v405 = vadd.f32 %v403, 1e-05
    %v406 = vrsqrt.pop %v405
    %v407 = vmul.f32 %v404, %v406
    %v408 = vlaneseq
    %v409 = vshrl.u32 %v408, 7
    %v410 = vsub.s32 0, %v409
    %v411 = vrot.slane %v168, %v410
    %v412 = vmul.f32 %v407, %v411
    %v413 = vlaneseq
    %v414 = vshrl.u32 %v413, 7
    %v415 = vsub.s32 0, %v414
    %v416 = vrot.slane %v169, %v415
    %v417 = vadd.f32 %v412, %v416
    %v418 = vtanh.pop %v417
    %v419 = vadd.f32 %v418, %v295
    %v420 = vld [vmem:[#allocation8] sm:$0xff]
    %v421 = vld [vmem:[#allocation8 + $0x8] sm:$0xff]
    %v422 = vld [vmem:[#allocation8 + $0x10] sm:$0xff]
    %v423 = vld [vmem:[#allocation8 + $0x18] sm:$0xff]
    %v424 = vld [vmem:[#allocation8 + $0x20] sm:$0xff]
    %v425 = vld [vmem:[#allocation8 + $0x28] sm:$0xff]
    %v426 = vld [vmem:[#allocation8 + $0x30] sm:$0xff]
    %v427 = vld [vmem:[#allocation8 + $0x38] sm:$0xff]
    %v428 = vld [vmem:[#allocation8 + $0x40] sm:$0xff]
    %v429 = vld [vmem:[#allocation8 + $0x48] sm:$0xff]
    %v430 = vld [vmem:[#allocation8 + $0x50] sm:$0xff]
    %v431 = vld [vmem:[#allocation8 + $0x58] sm:$0xff]
    %v432 = vld [vmem:[#allocation8 + $0x60] sm:$0xff]
    %v433 = vld [vmem:[#allocation8 + $0x68] sm:$0xff]
    %v434 = vld [vmem:[#allocation8 + $0x70] sm:$0xff]
    %v435 = vld [vmem:[#allocation8 + $0x78] sm:$0xff]
    %v436 = vlaneseq
    %v437 = vshrl.u32 %v436, 7
    %v438 = vsub.s32 0, %v437
    %v439 = vrot.slane %v170, %v438
    %440 = vmatprep.subr.mxu0 0.0
    %441 = vmatpush1.msra.mxu0 %v435
    %442 = vmatprep.subr.mxu0 0.0
    %443 = vmatpush1.msra.mxu0 %v434
    %444 = vmatprep.subr.mxu0 0.0
    %445 = vmatpush1.msra.mxu0 %v433
    %446 = vmatprep.subr.mxu0 0.0
    %447 = vmatpush1.msra.mxu0 %v432
    %448 = vmatprep.subr.mxu0 0.0
    %449 = vmatpush1.msra.mxu0 %v431
    %450 = vmatprep.subr.mxu0 0.0
    %451 = vmatpush1.msra.mxu0 %v430
    %452 = vmatprep.subr.mxu0 0.0
    %453 = vmatpush1.msra.mxu0 %v429
    %454 = vmatprep.subr.mxu0 0.0
    %455 = vmatpush1.msra.mxu0 %v428
    %456 = vmatprep.subr.mxu0 0.0
    %457 = vmatpush1.msra.mxu0 %v427
    %458 = vmatprep.subr.mxu0 0.0
    %459 = vmatpush1.msra.mxu0 %v426
    %460 = vmatprep.subr.mxu0 0.0
    %461 = vmatpush1.msra.mxu0 %v425
    %462 = vmatprep.subr.mxu0 0.0
    %463 = vmatpush1.msra.mxu0 %v424
    %464 = vmatprep.subr.mxu0 0.0
    %465 = vmatpush1.msra.mxu0 %v423
    %466 = vmatprep.subr.mxu0 0.0
    %467 = vmatpush1.msra.mxu0 %v422
    %468 = vmatprep.subr.mxu0 0.0
    %469 = vmatpush1.msra.mxu0 %v421
    %470 = vmatprep.subr.mxu0 0.0
    %471 = vmatpush1.msra.mxu0 %v420
    %472 = vmatprep.subr.mxu0 0.0
    %473 = vmatpush2.msra.mxu0 0.0
    %474 = vmatprep.subr.mxu0 0.0
    %475 = vmatpush2.msra.mxu0 0.0
    %476 = vmatprep.subr.mxu0 0.0
    %477 = vmatpush2.msra.mxu0 0.0
    %478 = vmatprep.subr.mxu0 0.0
    %479 = vmatpush2.msra.mxu0 0.0
    %480 = vmatprep.subr.mxu0 0.0
    %481 = vmatpush2.msra.mxu0 0.0
    %482 = vmatprep.subr.mxu0 0.0
    %483 = vmatpush2.msra.mxu0 0.0
    %484 = vmatprep.subr.mxu0 0.0
    %485 = vmatpush2.msra.mxu0 0.0
    %486 = vmatprep.subr.mxu0 0.0
    %487 = vmatpush2.msra.mxu0 0.0
    %488 = vmatprep.subr.mxu0 0.0
    %489 = vmatpush2.msra.mxu0 0.0
    %490 = vmatprep.subr.mxu0 0.0
    %491 = vmatpush2.msra.mxu0 0.0
    %492 = vmatprep.subr.mxu0 0.0
    %493 = vmatpush2.msra.mxu0 0.0
    %494 = vmatprep.subr.mxu0 0.0
    %495 = vmatpush2.msra.mxu0 0.0
    %496 = vmatprep.subr.mxu0 0.0
    %497 = vmatpush2.msra.mxu0 0.0
    %498 = vmatprep.subr.mxu0 0.0
    %499 = vmatpush2.msra.mxu0 0.0
    %500 = vmatprep.subr.mxu0 0.0
    %501 = vmatpush2.msra.mxu0 0.0
    %502 = vmatprep.subr.mxu0 0.0
    %503 = vmatpush2.msra.mxu0 0.0
    %504 = vmatprep.mubr.f32.mxu0 0.0
    %505 = vmatmul.mubr.f32.gmra.mxu0 %v419
    %v506 = vpop.f32.mrf.mxu0
    %v507 = vadd.f32 %v439, %v506
    %v508 = vpop.f32.mrf.mxu0
    %509 = vdwg.mxu0
    %510 = vst [vmem:[#allocation10] sm:$0xff] %v507
    // Predicated region
    $region42: #{tpu_custom_call.1} parent=1 // pred_check
      _
    $region43: #{tpu_custom_call.1} parent=1 // pred_check_branch
      %512 = sbr.rel (0) target = $region45
    $region44: #{tpu_custom_call.1} parent=1 // pred_region
      %s514 = ssub.s32 128, 128
      %515 = vsyncadd [#allocation4], %s514
      %s517 = sshll.u32 [#allocation10], 4
      %s518 = int_to_ptr.vmem [resolvable:$true] %s517
      %520 = dma.vmem_to_hbm [thread:$0]  %s518, 128, %s6, [#allocation4]
    $region45: #{tpu_custom_call.1} parent=1 // pred_fallthru
      _
    // Predicated region
    $region46: #{tpu_custom_call.1} parent=1 // pred_check
      _
    $region47: #{tpu_custom_call.1} parent=1 // pred_check_branch
      %522 = sbr.rel (0) target = $region49
    $region48: #{tpu_custom_call.1} parent=1 // pred_region
      %523 = dma.done [#allocation4], 128
    $region49: #{tpu_custom_call.1} parent=1 // pred_fallthru
      _
    %524 = vsyncpa [#allocation3], 1
    %525 = vsyncpa [#allocation6], 1
    %526 = vsyncpa [#allocation9], 1
    %527 = vsyncpa [#allocation4], 1

</llo_original>
